<compile_context>
chip_gen: v7x
topology: tpu7x:2x2x1
jax: 0.10.0
libtpu: 0.0.40
codegen_flags: <defaults>
</compile_context>

<pallas_src>
import jax
import jax.numpy as jnp
from jax.experimental import pallas as pl
from jax.experimental.pallas import tpu as pltpu

_LANES_CANDIDATES = (512, 256, 128)   # lane-dense slab widths (multiples of 128)
_TARGET_BLOCK_ELEMS = 512 * 1024      # ~2 MiB f32 per block per buffer


def _cdiv(a: int, b: int) -> int:
    return -(-a // b)


def _round_up(v: int, m: int) -> int:
    return _cdiv(v, m) * m


def _pick_lanes(total: int):
    """Pick a lane width that divides `total` (no pad); else fall back to 128 + pad."""
    for lanes in _LANES_CANDIDATES:
        if total % lanes == 0:
            return lanes, 0
    lanes = 128
    return lanes, _round_up(total, lanes) - total


def _pick_row_tile(rows: int, lanes: int) -> int:
    """~2 MiB row blocks; prefer an even grid-step count for v7x megacore sharding."""
    tile = max(8, _TARGET_BLOCK_ELEMS // lanes)
    if rows <= tile:
        return rows                       # single block; block dim == full array dim is allowed
    tile = _round_up(tile, 8)
    steps = _cdiv(rows, tile)
    if steps > 1 and steps % 2 == 1:
        alt = _round_up(_cdiv(rows, steps + 1), 8)
        if alt >= 8 and _cdiv(rows, alt) % 2 == 0:
            tile = alt
    return tile


def _logreg_kernel(wh_ref, bh_ref, x_ref, o_ref):
    # wh_ref, bh_ref: (1, 1) f32 in SMEM holding 0.5*w and 0.5*b (scalar path).
    # x_ref, o_ref:   (row_tile, LANES) f32 tiles in VMEM.
    wh = wh_ref[0, 0]
    bh = bh_ref[0, 0]
    # sigmoid(w*x + b) = 0.5 * tanh(0.5*(w*x + b)) + 0.5  -> one EUP transcendental,
    # no approximate reciprocal (exact to f32 roundoff).
    o_ref[...] = 0.5 * jnp.tanh(x_ref[...] * wh + bh) + 0.5


@jax.jit
def regression_model_forward(x, weight, bias):
    """x: (N, 1) f32; weight: (1, 1) f32; bias: (1,) f32 -> sigmoid(x @ w.T + b): (N, 1) f32.

    NOTE: for a handful of elements (the torch example's N=5) a plain fused
    jax.nn.sigmoid(x * w + b) beats any pallas_call dispatch; this kernel pays off once
    N is large enough to be HBM-bandwidth bound.
    """
    n, f = x.shape
    assert f == 1, "RegressionModel expects a single input feature"
    total = n * f

    lanes, pad = _pick_lanes(total)
    padded_total = total + pad
    rows = padded_total // lanes
    row_tile = _pick_row_tile(rows, lanes)
    num_tiles = _cdiv(rows, row_tile)

    if pad == 0:
        slab = x.reshape(rows, lanes)                 # free metadata reshape, no copy
    else:
        flat = x.reshape(total)                       # ragged fallback: one pad copy
        slab = jnp.pad(flat, (0, pad)).reshape(rows, lanes)

    # Fold the tanh half-scale into the scalar parameters (SMEM scalar path).
    wh = (0.5 * weight).reshape(1, 1).astype(jnp.float32)
    bh = (0.5 * bias).reshape(1, 1).astype(jnp.float32)

    out_slab = pl.pallas_call(
        _logreg_kernel,
        out_shape=jax.ShapeDtypeStruct((rows, lanes), jnp.float32),
        grid=(num_tiles,),
        in_specs=[
            pl.BlockSpec(memory_space=pltpu.MemorySpace.SMEM),   # 0.5 * weight
            pl.BlockSpec(memory_space=pltpu.MemorySpace.SMEM),   # 0.5 * bias
            pl.BlockSpec((row_tile, lanes), lambda i: (i, 0)),   # x slab tile
        ],
        out_specs=pl.BlockSpec((row_tile, lanes), lambda i: (i, 0)),
        compiler_params=pltpu.CompilerParams(
            dimension_semantics=("parallel",),
        ),
        cost_estimate=pl.CostEstimate(
            flops=4 * rows * lanes,
            transcendentals=rows * lanes,
            bytes_accessed=8 * rows * lanes,
        ),
    )(wh, bh, slab)

    if pad == 0:
        return out_slab.reshape(n, f)                 # free metadata reshape
    return out_slab.reshape(-1)[:total].reshape(n, f)


if __name__ == "__main__":
    key = jax.random.PRNGKey(0)
    kw, kb, kx, ky = jax.random.split(key, 4)

    # nn.Linear(1, 1) parameter shapes; PyTorch init is U(-1, 1) for fan_in=1.
    weight = jax.random.uniform(kw, (1, 1), minval=-1.0, maxval=1.0, dtype=jnp.float32)
    bias = jax.random.uniform(kb, (1,), minval=-1.0, maxval=1.0, dtype=jnp.float32)

    def ref(xv):
        return jax.nn.sigmoid(xv @ weight.T + bias)

    # 1) Input mirroring the torch example: x = [1, 2, 3, 4, 5] unsqueezed to (5, 1).
    #    Exercises the ragged/pad fallback with a single (rows, 128) block.
    x_small = jnp.array([1.0, 2.0, 3.0, 4.0, 5.0], dtype=jnp.float32).reshape(5, 1)
    out_small = jax.block_until_ready(regression_model_forward(x_small, weight, bias))
    assert out_small.shape == (5, 1)
    assert jnp.allclose(out_small, ref(x_small), atol=1e-4, rtol=1e-4)

    # 2) Ragged mid-size input: pad path, still single block.
    x_mid = jax.random.normal(kx, (3000, 1), dtype=jnp.float32)
    out_mid = jax.block_until_ready(regression_model_forward(x_mid, weight, bias))
    assert out_mid.shape == (3000, 1)
    assert jnp.allclose(out_mid, ref(x_mid), atol=1e-4, rtol=1e-4)

    # 3) Lane-dense batch (divisible by 512): no pad, no output slice, even multi-tile
    #    pipelined grid (rows=2048, row_tile=1024 -> 2 steps).
    x_big = jax.random.normal(ky, (1_048_576, 1), dtype=jnp.float32)
    out_big = jax.block_until_ready(regression_model_forward(x_big, weight, bias))
    assert out_big.shape == (1_048_576, 1)
    assert jnp.allclose(out_big, ref(x_big), atol=1e-4, rtol=1e-4)

    print("KERNEL_OK")
</pallas_src>

<mosaic_0001>
module attributes {stable_mosaic.version = 11 : i64} {
  func.func @_logreg_kernel(%arg0: i32, %arg1: memref<1x1xf32, #tpu.memory_space<smem>>, %arg2: memref<1x1xf32, #tpu.memory_space<smem>>, %arg3: memref<1x128xf32, #tpu.memory_space<vmem>>, %arg4: memref<1x128xf32, #tpu.memory_space<vmem>>) attributes {dimension_semantics = [#tpu.dimension_semantics<parallel>], iteration_bounds = array<i64: 1>, scalar_prefetch = 0 : i64, scratch_operands = 0 : i64, tpu.core_type = #tpu.core_type<tc>, window_params = [{transform_indices = @transform_0, window_bounds = array<i64: 1, 1>}, {transform_indices = @transform_1, window_bounds = array<i64: 1, 1>}, {transform_indices = @transform_2, window_bounds = array<i64: 1, 128>}, {transform_indices = @transform_3, window_bounds = array<i64: 1, 128>}]} {
    %c0 = arith.constant 0 : index
    %c0_0 = arith.constant 0 : index
    %0 = memref.load %arg1[%c0, %c0_0] : memref<1x1xf32, #tpu.memory_space<smem>>
    %c0_1 = arith.constant 0 : index
    %c0_2 = arith.constant 0 : index
    %1 = memref.load %arg2[%c0_1, %c0_2] : memref<1x1xf32, #tpu.memory_space<smem>>
    %c0_3 = arith.constant 0 : index
    %c0_4 = arith.constant 0 : index
    %2 = vector.load %arg3[%c0_3, %c0_4] : memref<1x128xf32, #tpu.memory_space<vmem>>, vector<1x128xf32>
    %3 = vector.broadcast %0 : f32 to vector<1x128xf32>
    %4 = arith.mulf %2, %3 : vector<1x128xf32>
    %5 = vector.broadcast %1 : f32 to vector<1x128xf32>
    %6 = arith.addf %4, %5 : vector<1x128xf32>
    %7 = math.tanh %6 : vector<1x128xf32>
    %cst = arith.constant 5.000000e-01 : f32
    %8 = vector.broadcast %cst : f32 to vector<1x128xf32>
    %9 = arith.mulf %8, %7 : vector<1x128xf32>
    %cst_5 = arith.constant 5.000000e-01 : f32
    %10 = vector.broadcast %cst_5 : f32 to vector<1x128xf32>
    %11 = arith.addf %9, %10 : vector<1x128xf32>
    %c0_6 = arith.constant 0 : index
    %c0_7 = arith.constant 0 : index
    %12 = vector.load %arg4[%c0_6, %c0_7] : memref<1x128xf32, #tpu.memory_space<vmem>>, vector<1x128xf32>
    tpu.vector_store %arg4[%c0_6, %c0_7], %11 {strides = array<i32>} : memref<1x128xf32, #tpu.memory_space<vmem>>, vector<1x128xf32>,
    return
  }
  func.func @transform_0(%arg0: i32) -> (i32, i32) {
    %c0_i32 = arith.constant 0 : i32
    %c0_i32_0 = arith.constant 0 : i32
    %c0_i32_1 = arith.constant 0 : i32
    return %c0_i32, %c0_i32_0 : i32, i32
  }
  func.func @transform_1(%arg0: i32) -> (i32, i32) {
    %c0_i32 = arith.constant 0 : i32
    %c0_i32_0 = arith.constant 0 : i32
    %c0_i32_1 = arith.constant 0 : i32
    return %c0_i32, %c0_i32_0 : i32, i32
  }
  func.func @transform_2(%arg0: i32) -> (i32, i32) {
    %c0_i32 = arith.constant 0 : i32
    %c0_i32_0 = arith.constant 0 : i32
    return %arg0, %c0_i32 : i32, i32
  }
  func.func @transform_3(%arg0: i32) -> (i32, i32) {
    %c0_i32 = arith.constant 0 : i32
    %c0_i32_0 = arith.constant 0 : i32
    return %arg0, %c0_i32 : i32, i32
  }
}

</mosaic_0001>

<llo_original>
// kernel: regression_model_forward.1
$region0: #{regression_model_forward.1}
  #allocation0 [shape = 'u32[]', space=smem, size = 0x4, offset = 0x4, fixed_abs, tag = 'smem constant byte address 0x4 - core index']
  #allocation1 [shape = 'u32[144,128]{1,0:T(1,128)}', space=vmem, size = 0x12000, scoped, tag = 'internal scratch']
  #allocation2 [shape = 'f32[1,1]{1,0:T(1,128)S(6)}', space=smem, size = 0x200, scoped, tag = 'scoped memory for regression_model_forward.1']
  #allocation3 [shape = 'f32[1,1]{1,0:T(1,128)S(6)}', space=smem, size = 0x200, scoped, tag = 'scoped memory for regression_model_forward.1']
  %s0 = inlined_call_operand.<no memory space> [shape: f32[1,1], index: 0, kind: input, shape index: {}]
  %s1 = inlined_call_operand.<no memory space> [shape: f32[1,1], index: 1, kind: input, shape index: {}]
  %s2 = inlined_call_operand.vmem [shape: f32[1,128], index: 2, kind: input, shape index: {}]
  %s3 = inlined_call_operand.vmem [shape: f32[1,128], index: 3, kind: output, shape index: {}]
  %s4 = sld [smem:[#allocation0]]
  $region22: #{regression_model_forward.1} parent=0
    _
  %s6 = ssub.s32 1, %s4
  %s7 = scalar_select 0, %s6, %s4
  %8 = sst [smem:[#allocation2]] %s0
  %9 = sst [smem:[#allocation3]] %s1
  // Predicated region
  $region2: #{regression_model_forward.1} parent=0 // pred_check
    _
  $region3: #{regression_model_forward.1} parent=0 // pred_check_branch
    %11 = sbr.rel (0) target = $region5
  $region4: #{regression_model_forward.1} parent=0 // pred_region
    _
  $region5: #{regression_model_forward.1} parent=0 // pred_fallthru
    _
  // Predicated region
  $region6: #{regression_model_forward.1} parent=0 // pred_check
    _
  $region7: #{regression_model_forward.1} parent=0 // pred_check_branch
    %13 = sbr.rel (0) target = $region9
  $region8: #{regression_model_forward.1} parent=0 // pred_region
    _
  $region9: #{regression_model_forward.1} parent=0 // pred_fallthru
    _
  // Predicated region
  $region10: #{regression_model_forward.1} parent=0 // pred_check
    _
  $region11: #{regression_model_forward.1} parent=0 // pred_check_branch
    %15 = sbr.rel (0) target = $region13
  $region12: #{regression_model_forward.1} parent=0 // pred_region
    _
  $region13: #{regression_model_forward.1} parent=0 // pred_fallthru
    _
  %s16 = sld [smem:[#allocation2]]
  %s17 = sld [smem:[#allocation3]]
  %v18 = vld [vmem:[%s2] sm:$0x1]
  %v19 = vstv %s16
  %v20 = vmul.f32 %v18, %v19
  %v21 = vstv %s17
  %v22 = vadd.f32 %v20, %v21
  %v23 = vtanh.pop %v22
  %v24 = vmul.f32 %v23, 0.5
  %v25 = vadd.f32 %v24, 0.5
  %26 = vst [vmem:[%s3] sm:$0x1] %v25
  // Predicated region
  $region14: #{regression_model_forward.1} parent=0 // pred_check
    _
  $region15: #{regression_model_forward.1} parent=0 // pred_check_branch
    %28 = sbr.rel (0) target = $region17
  $region16: #{regression_model_forward.1} parent=0 // pred_region
    _
  $region17: #{regression_model_forward.1} parent=0 // pred_fallthru
    _
  // Predicated region
  $region18: #{regression_model_forward.1} parent=0 // pred_check
    _
  $region19: #{regression_model_forward.1} parent=0 // pred_check_branch
    %30 = sbr.rel (0) target = $region21
  $region20: #{regression_model_forward.1} parent=0 // pred_region
    _
  $region21: #{regression_model_forward.1} parent=0 // pred_fallthru
    _

</llo_original>
